<compile_context>
chip_gen: v7x
topology: tpu7x:2x2x1
jax: 0.10.0
libtpu: 0.0.40
codegen_flags: <defaults>
</compile_context>

<pallas_src>
import functools

import jax
import jax.numpy as jnp
from jax.experimental import pallas as pl
from jax.experimental.pallas import tpu as pltpu


def _spatial_attention_kernel(w_ref, b_ref, idx_ref, x_ref, out_ref, *, W):
    # w_ref  : SMEM (18,) f32 -- conv weights [c_in, kh, kw], BN scale folded in
    # b_ref  : SMEM (1,)  f32 -- folded BN bias
    # idx_ref: VMEM (2, H*W) i32 -- row 0: flat index i*W + j, row 1: column j
    # x_ref  : VMEM (BT, C, H*W)   (input dtype preserved)
    # out_ref: VMEM (BT, C, H*W)
    BT, C, HW = x_ref.shape

    # Hoisted scalars / masks (shared across the batch tile and all conv taps).
    ws = [w_ref[i] for i in range(2 * 9)]
    bias = b_ref[0]
    k_idx = idx_ref[0:1, :]                       # (1, HW) flat spatial index
    col = idx_ref[1:2, :]                         # (1, HW) column index j

    row_ok = {-1: k_idx >= W, 0: None, 1: k_idx < (HW - W)}
    col_ok = {-1: col >= 1, 0: None, 1: col <= (W - 2)}

    inv_c = 1.0 / C

    for b in range(BT):
        xb = x_ref[b].astype(jnp.float32)         # (C, HW), loaded once

        # Fused single-pass channel max + mean.
        p_max = xb[0:1, :]
        p_sum = xb[0:1, :]
        for c in range(1, C):
            row = xb[c:c + 1, :]
            p_max = jnp.maximum(p_max, row)
            p_sum = p_sum + row
        pooled = (p_max, p_sum * inv_c)           # (max, mean), each (1, HW)

        # 3x3 "same" conv on the two flat pooled maps:
        #   y[i, j] += w[c, dr+1, dc+1] * pooled_c[i+dr, j+dc]   (zero outside)
        # Row/column shifts become lane rotations of the flat map; out-of-range
        # taps are zeroed with the precomputed masks.
        acc = jnp.zeros((1, HW), jnp.float32)
        for dr in (-1, 0, 1):
            for dc in (-1, 0, 1):
                off = dr * W + dc
                term = None
                for ci in range(2):
                    src = pooled[ci]
                    shifted = src if off == 0 else pltpu.roll(
                        src, shift=(-off) % HW, axis=1)
                    w = ws[ci * 9 + (dr + 1) * 3 + (dc + 1)]
                    t = shifted * w
                    term = t if term is None else term + t
                valid = row_ok[dr]
                if col_ok[dc] is not None:
                    valid = (col_ok[dc] if valid is None
                             else jnp.logical_and(valid, col_ok[dc]))
                if valid is not None:
                    term = jnp.where(valid, term, 0.0)
                acc = acc + term

        scale = jax.nn.sigmoid(acc + bias)        # (1, HW) spatial attention map
        out_ref[b] = (xb * scale).astype(out_ref.dtype)


def _pick_batch_tile(batch, per_batch_bytes,
                     min_block_bytes=256 * 1024,
                     max_block_bytes=2 * 1024 * 1024,
                     max_tile=8):
    """Largest/fattest batch tile that divides `batch` and keeps blocks VMEM-friendly."""
    divisors = [d for d in range(1, min(batch, max_tile) + 1) if batch % d == 0]
    for d in divisors:            # smallest divisor giving a reasonably fat block
        if min_block_bytes <= d * per_batch_bytes <= max_block_bytes:
            return d
    best = 1
    for d in divisors:            # otherwise the largest block under the cap
        if d * per_batch_bytes <= max_block_bytes:
            best = d
    return best


def spatial_attention(x, conv_w, bn_gamma, bn_beta, bn_mean, bn_var, eps=1e-5):
    """x: (B, C, H, W). conv_w: (1, 2, 3, 3) PyTorch OIHW. Returns (B, C, H, W)."""
    B, C, H, W = x.shape
    HW = H * W

    # Lane-dense view of x: (B, C, H*W). Pure metadata reshape, no HBM copy.
    x2 = x.reshape(B, C, HW)

    # Fold eval-mode BatchNorm2d(1): y_bn = a*y + b; fold `a` into the conv
    # weights so the kernel only adds `b`.
    a = (bn_gamma.astype(jnp.float32) /
         jnp.sqrt(bn_var.astype(jnp.float32) + eps)).reshape(())
    b = (bn_beta.astype(jnp.float32) -
         bn_mean.astype(jnp.float32) * a).reshape(())
    w_flat = a * conv_w.astype(jnp.float32)[0].reshape(-1)          # (18,)
    b_arr = b.reshape(1)

    # Precomputed flat / column indices for the conv edge masks.
    flat_idx = jnp.arange(HW, dtype=jnp.int32)
    idx_arr = jnp.stack([flat_idx, flat_idx % jnp.int32(W)], axis=0)  # (2, HW)

    per_batch_bytes = C * HW * jnp.dtype(x.dtype).itemsize
    BT = _pick_batch_tile(B, per_batch_bytes)
    grid = (B // BT,)

    kernel = functools.partial(_spatial_attention_kernel, W=W)

    out = pl.pallas_call(
        kernel,
        out_shape=jax.ShapeDtypeStruct((B, C, HW), x.dtype),
        grid_spec=pltpu.PrefetchScalarGridSpec(
            num_scalar_prefetch=0,
            grid=grid,
            in_specs=[
                pl.BlockSpec(memory_space=pltpu.MemorySpace.SMEM),   # conv weights
                pl.BlockSpec(memory_space=pltpu.MemorySpace.SMEM),   # folded BN bias
                pl.BlockSpec((2, HW), lambda i: (0, 0)),             # index/column map
                pl.BlockSpec((BT, C, HW), lambda i: (i, 0, 0)),      # x block
            ],
            out_specs=pl.BlockSpec((BT, C, HW), lambda i: (i, 0, 0)),
        ),
        compiler_params=pltpu.CompilerParams(
            dimension_semantics=("parallel",),
            vmem_limit_bytes=32 * 1024 * 1024,
        ),
    )(w_flat, b_arr, idx_arr, x2)
    return out.reshape(B, C, H, W)


def _reference(x, conv_w, bn_gamma, bn_beta, bn_mean, bn_var, eps=1e-5):
    # Pure-JAX reference for a silent correctness check.
    p_max = jnp.max(x, axis=1, keepdims=True)
    p_mean = jnp.mean(x, axis=1, keepdims=True)
    pooled = jnp.concatenate([p_max, p_mean], axis=1)               # (B,2,H,W)
    y = jax.lax.conv_general_dilated(
        pooled, conv_w, window_strides=(1, 1), padding=((1, 1), (1, 1)),
        dimension_numbers=("NCHW", "OIHW", "NCHW"))                 # (B,1,H,W)
    a = bn_gamma / jnp.sqrt(bn_var + eps)
    b = bn_beta - bn_mean * a
    y = y * a.reshape(1, -1, 1, 1) + b.reshape(1, -1, 1, 1)
    return x * jax.nn.sigmoid(y)


if __name__ == "__main__":
    key = jax.random.PRNGKey(0)
    k_x, k_w = jax.random.split(key)

    B, C, H, W = 2, 4, 16, 16
    x = jax.random.normal(k_x, (B, C, H, W), dtype=jnp.float32)

    # Deterministic parameter init (synthetic, not a checkpoint).
    conv_w = 0.1 * jax.random.normal(k_w, (1, 2, 3, 3), dtype=jnp.float32)
    bn_gamma = jnp.ones((1,), jnp.float32)      # PyTorch BatchNorm2d defaults
    bn_beta = jnp.zeros((1,), jnp.float32)
    bn_mean = jnp.zeros((1,), jnp.float32)      # inference-mode running stats
    bn_var = jnp.ones((1,), jnp.float32)
    # TODO(synk): PyTorch BN in train mode would use batch stats; eval-mode
    # running-stat BN is implemented here (matches module.eval()).

    out = spatial_attention(x, conv_w, bn_gamma, bn_beta, bn_mean, bn_var)
    out = jax.block_until_ready(out)

    ref = _reference(x, conv_w, bn_gamma, bn_beta, bn_mean, bn_var)
    if not bool(jnp.allclose(out, ref, atol=1e-5, rtol=1e-5)):
        max_err = float(jnp.max(jnp.abs(out - ref)))
        raise AssertionError(
            f"Pallas kernel output mismatch vs reference (max abs err {max_err})")

    print("KERNEL_OK")
</pallas_src>

<mosaic_0001>
module attributes {stable_mosaic.version = 11 : i64} {
  func.func @_spatial_attention_kernel(%arg0: i32, %arg1: memref<18xf32, #tpu.memory_space<smem>>, %arg2: memref<1xf32, #tpu.memory_space<smem>>, %arg3: memref<2x256xi32, #tpu.memory_space<vmem>>, %arg4: memref<2x4x256xf32, #tpu.memory_space<vmem>>, %arg5: memref<2x4x256xf32, #tpu.memory_space<vmem>>) attributes {dimension_semantics = [#tpu.dimension_semantics<parallel>], iteration_bounds = array<i64: 1>, scalar_prefetch = 0 : i64, scratch_operands = 0 : i64, tpu.core_type = #tpu.core_type<tc>, window_params = [{transform_indices = @transform_0, window_bounds = array<i64: 18>}, {transform_indices = @transform_1, window_bounds = array<i64: 1>}, {pipeline_mode = #tpu.pipeline_mode<synchronous>, transform_indices = @transform_2, window_bounds = array<i64: 2, 256>}, {transform_indices = @transform_3, window_bounds = array<i64: 2, 4, 256>}, {transform_indices = @transform_4, window_bounds = array<i64: 2, 4, 256>}]} {
    %c0 = arith.constant 0 : index
    %0 = memref.load %arg1[%c0] : memref<18xf32, #tpu.memory_space<smem>>
    %c1 = arith.constant 1 : index
    %1 = memref.load %arg1[%c1] : memref<18xf32, #tpu.memory_space<smem>>
    %c2 = arith.constant 2 : index
    %2 = memref.load %arg1[%c2] : memref<18xf32, #tpu.memory_space<smem>>
    %c3 = arith.constant 3 : index
    %3 = memref.load %arg1[%c3] : memref<18xf32, #tpu.memory_space<smem>>
    %c4 = arith.constant 4 : index
    %4 = memref.load %arg1[%c4] : memref<18xf32, #tpu.memory_space<smem>>
    %c5 = arith.constant 5 : index
    %5 = memref.load %arg1[%c5] : memref<18xf32, #tpu.memory_space<smem>>
    %c6 = arith.constant 6 : index
    %6 = memref.load %arg1[%c6] : memref<18xf32, #tpu.memory_space<smem>>
    %c7 = arith.constant 7 : index
    %7 = memref.load %arg1[%c7] : memref<18xf32, #tpu.memory_space<smem>>
    %c8 = arith.constant 8 : index
    %8 = memref.load %arg1[%c8] : memref<18xf32, #tpu.memory_space<smem>>
    %c9 = arith.constant 9 : index
    %9 = memref.load %arg1[%c9] : memref<18xf32, #tpu.memory_space<smem>>
    %c10 = arith.constant 10 : index
    %10 = memref.load %arg1[%c10] : memref<18xf32, #tpu.memory_space<smem>>
    %c11 = arith.constant 11 : index
    %11 = memref.load %arg1[%c11] : memref<18xf32, #tpu.memory_space<smem>>
    %c12 = arith.constant 12 : index
    %12 = memref.load %arg1[%c12] : memref<18xf32, #tpu.memory_space<smem>>
    %c13 = arith.constant 13 : index
    %13 = memref.load %arg1[%c13] : memref<18xf32, #tpu.memory_space<smem>>
    %c14 = arith.constant 14 : index
    %14 = memref.load %arg1[%c14] : memref<18xf32, #tpu.memory_space<smem>>
    %c15 = arith.constant 15 : index
    %15 = memref.load %arg1[%c15] : memref<18xf32, #tpu.memory_space<smem>>
    %c16 = arith.constant 16 : index
    %16 = memref.load %arg1[%c16] : memref<18xf32, #tpu.memory_space<smem>>
    %c17 = arith.constant 17 : index
    %17 = memref.load %arg1[%c17] : memref<18xf32, #tpu.memory_space<smem>>
    %c0_0 = arith.constant 0 : index
    %18 = memref.load %arg2[%c0_0] : memref<1xf32, #tpu.memory_space<smem>>
    %c0_1 = arith.constant 0 : index
    %c0_2 = arith.constant 0 : index
    %19 = vector.load %arg3[%c0_1, %c0_2] : memref<2x256xi32, #tpu.memory_space<vmem>>, vector<1x256xi32>
    %c1_3 = arith.constant 1 : index
    %c0_4 = arith.constant 0 : index
    %20 = vector.load %arg3[%c1_3, %c0_4] : memref<2x256xi32, #tpu.memory_space<vmem>>, vector<1x256xi32>
    %c16_i32 = arith.constant 16 : i32
    %21 = vector.broadcast %c16_i32 : i32 to vector<1x256xi32>
    %22 = arith.cmpi sge, %19, %21 : vector<1x256xi32>
    %c240_i32 = arith.constant 240 : i32
    %23 = vector.broadcast %c240_i32 : i32 to vector<1x256xi32>
    %24 = arith.cmpi slt, %19, %23 : vector<1x256xi32>
    %c1_i32 = arith.constant 1 : i32
    %25 = vector.broadcast %c1_i32 : i32 to vector<1x256xi32>
    %26 = arith.cmpi sge, %20, %25 : vector<1x256xi32>
    %c14_i32 = arith.constant 14 : i32
    %27 = vector.broadcast %c14_i32 : i32 to vector<1x256xi32>
    %28 = arith.cmpi sle, %20, %27 : vector<1x256xi32>
    %c0_5 = arith.constant 0 : index
    %c0_6 = arith.constant 0 : index
    %c0_7 = arith.constant 0 : index
    %29 = vector.load %arg4[%c0_5, %c0_6, %c0_7] : memref<2x4x256xf32, #tpu.memory_space<vmem>>, vector<1x4x256xf32>
    %30 = vector.shape_cast %29 : vector<1x4x256xf32> to vector<4x256xf32>
    %31 = vector.extract_strided_slice %30 {offsets = [0, 0], sizes = [1, 256], strides = [1, 1]} : vector<4x256xf32> to vector<1x256xf32>
    %32 = vector.extract_strided_slice %30 {offsets = [0, 0], sizes = [1, 256], strides = [1, 1]} : vector<4x256xf32> to vector<1x256xf32>
    %33 = vector.extract_strided_slice %30 {offsets = [1, 0], sizes = [1, 256], strides = [1, 1]} : vector<4x256xf32> to vector<1x256xf32>
    %34 = arith.maximumf %31, %33 : vector<1x256xf32>
    %35 = arith.addf %32, %33 : vector<1x256xf32>
    %36 = vector.extract_strided_slice %30 {offsets = [2, 0], sizes = [1, 256], strides = [1, 1]} : vector<4x256xf32> to vector<1x256xf32>
    %37 = arith.maximumf %34, %36 : vector<1x256xf32>
    %38 = arith.addf %35, %36 : vector<1x256xf32>
    %39 = vector.extract_strided_slice %30 {offsets = [3, 0], sizes = [1, 256], strides = [1, 1]} : vector<4x256xf32> to vector<1x256xf32>
    %40 = arith.maximumf %37, %39 : vector<1x256xf32>
    %41 = arith.addf %38, %39 : vector<1x256xf32>
    %cst = arith.constant 2.500000e-01 : f32
    %42 = vector.broadcast %cst : f32 to vector<1x256xf32>
    %43 = arith.mulf %41, %42 : vector<1x256xf32>
    %cst_8 = arith.constant 0.000000e+00 : f32
    %44 = vector.broadcast %cst_8 : f32 to vector<1x256xf32>
    %c17_i32 = arith.constant 17 : i32
    %45 = tpu.dynamic_rotate %40 by %c17_i32 dim 1 : vector<1x256xf32>, i32 -> vector<1x256xf32>
    %46 = vector.broadcast %0 : f32 to vector<1x256xf32>
    %47 = arith.mulf %45, %46 : vector<1x256xf32>
    %c17_i32_9 = arith.constant 17 : i32
    %48 = tpu.dynamic_rotate %43 by %c17_i32_9 dim 1 : vector<1x256xf32>, i32 -> vector<1x256xf32>
    %49 = vector.broadcast %9 : f32 to vector<1x256xf32>
    %50 = arith.mulf %48, %49 : vector<1x256xf32>
    %51 = arith.addf %47, %50 : vector<1x256xf32>
    %52 = arith.andi %22, %26 : vector<1x256xi1>
    %cst_10 = arith.constant 0.000000e+00 : f32
    %53 = vector.broadcast %cst_10 : f32 to vector<1x256xf32>
    %54 = arith.select %52, %51, %53 : vector<1x256xi1>, vector<1x256xf32>
    %55 = arith.addf %44, %54 : vector<1x256xf32>
    %c16_i32_11 = arith.constant 16 : i32
    %56 = tpu.dynamic_rotate %40 by %c16_i32_11 dim 1 : vector<1x256xf32>, i32 -> vector<1x256xf32>
    %57 = vector.broadcast %1 : f32 to vector<1x256xf32>
    %58 = arith.mulf %56, %57 : vector<1x256xf32>
    %c16_i32_12 = arith.constant 16 : i32
    %59 = tpu.dynamic_rotate %43 by %c16_i32_12 dim 1 : vector<1x256xf32>, i32 -> vector<1x256xf32>
    %60 = vector.broadcast %10 : f32 to vector<1x256xf32>
    %61 = arith.mulf %59, %60 : vector<1x256xf32>
    %62 = arith.addf %58, %61 : vector<1x256xf32>
    %cst_13 = arith.constant 0.000000e+00 : f32
    %63 = vector.broadcast %cst_13 : f32 to vector<1x256xf32>
    %64 = arith.select %22, %62, %63 : vector<1x256xi1>, vector<1x256xf32>
    %65 = arith.addf %55, %64 : vector<1x256xf32>
    %c15_i32 = arith.constant 15 : i32
    %66 = tpu.dynamic_rotate %40 by %c15_i32 dim 1 : vector<1x256xf32>, i32 -> vector<1x256xf32>
    %67 = vector.broadcast %2 : f32 to vector<1x256xf32>
    %68 = arith.mulf %66, %67 : vector<1x256xf32>
    %c15_i32_14 = arith.constant 15 : i32
    %69 = tpu.dynamic_rotate %43 by %c15_i32_14 dim 1 : vector<1x256xf32>, i32 -> vector<1x256xf32>
    %70 = vector.broadcast %11 : f32 to vector<1x256xf32>
    %71 = arith.mulf %69, %70 : vector<1x256xf32>
    %72 = arith.addf %68, %71 : vector<1x256xf32>
    %73 = arith.andi %22, %28 : vector<1x256xi1>
    %cst_15 = arith.constant 0.000000e+00 : f32
    %74 = vector.broadcast %cst_15 : f32 to vector<1x256xf32>
    %75 = arith.select %73, %72, %74 : vector<1x256xi1>, vector<1x256xf32>
    %76 = arith.addf %65, %75 : vector<1x256xf32>
    %c1_i32_16 = arith.constant 1 : i32
    %77 = tpu.dynamic_rotate %40 by %c1_i32_16 dim 1 : vector<1x256xf32>, i32 -> vector<1x256xf32>
    %78 = vector.broadcast %3 : f32 to vector<1x256xf32>
    %79 = arith.mulf %77, %78 : vector<1x256xf32>
    %c1_i32_17 = arith.constant 1 : i32
    %80 = tpu.dynamic_rotate %43 by %c1_i32_17 dim 1 : vector<1x256xf32>, i32 -> vector<1x256xf32>
    %81 = vector.broadcast %12 : f32 to vector<1x256xf32>
    %82 = arith.mulf %80, %81 : vector<1x256xf32>
    %83 = arith.addf %79, %82 : vector<1x256xf32>
    %cst_18 = arith.constant 0.000000e+00 : f32
    %84 = vector.broadcast %cst_18 : f32 to vector<1x256xf32>
    %85 = arith.select %26, %83, %84 : vector<1x256xi1>, vector<1x256xf32>
    %86 = arith.addf %76, %85 : vector<1x256xf32>
    %87 = vector.broadcast %4 : f32 to vector<1x256xf32>
    %88 = arith.mulf %40, %87 : vector<1x256xf32>
    %89 = vector.broadcast %13 : f32 to vector<1x256xf32>
    %90 = arith.mulf %43, %89 : vector<1x256xf32>
    %91 = arith.addf %88, %90 : vector<1x256xf32>
    %92 = arith.addf %86, %91 : vector<1x256xf32>
    %c255_i32 = arith.constant 255 : i32
    %93 = tpu.dynamic_rotate %40 by %c255_i32 dim 1 : vector<1x256xf32>, i32 -> vector<1x256xf32>
    %94 = vector.broadcast %5 : f32 to vector<1x256xf32>
    %95 = arith.mulf %93, %94 : vector<1x256xf32>
    %c255_i32_19 = arith.constant 255 : i32
    %96 = tpu.dynamic_rotate %43 by %c255_i32_19 dim 1 : vector<1x256xf32>, i32 -> vector<1x256xf32>
    %97 = vector.broadcast %14 : f32 to vector<1x256xf32>
    %98 = arith.mulf %96, %97 : vector<1x256xf32>
    %99 = arith.addf %95, %98 : vector<1x256xf32>
    %cst_20 = arith.constant 0.000000e+00 : f32
    %100 = vector.broadcast %cst_20 : f32 to vector<1x256xf32>
    %101 = arith.select %28, %99, %100 : vector<1x256xi1>, vector<1x256xf32>
    %102 = arith.addf %92, %101 : vector<1x256xf32>
    %c241_i32 = arith.constant 241 : i32
    %103 = tpu.dynamic_rotate %40 by %c241_i32 dim 1 : vector<1x256xf32>, i32 -> vector<1x256xf32>
    %104 = vector.broadcast %6 : f32 to vector<1x256xf32>
    %105 = arith.mulf %103, %104 : vector<1x256xf32>
    %c241_i32_21 = arith.constant 241 : i32
    %106 = tpu.dynamic_rotate %43 by %c241_i32_21 dim 1 : vector<1x256xf32>, i32 -> vector<1x256xf32>
    %107 = vector.broadcast %15 : f32 to vector<1x256xf32>
    %108 = arith.mulf %106, %107 : vector<1x256xf32>
    %109 = arith.addf %105, %108 : vector<1x256xf32>
    %110 = arith.andi %24, %26 : vector<1x256xi1>
    %cst_22 = arith.constant 0.000000e+00 : f32
    %111 = vector.broadcast %cst_22 : f32 to vector<1x256xf32>
    %112 = arith.select %110, %109, %111 : vector<1x256xi1>, vector<1x256xf32>
    %113 = arith.addf %102, %112 : vector<1x256xf32>
    %c240_i32_23 = arith.constant 240 : i32
    %114 = tpu.dynamic_rotate %40 by %c240_i32_23 dim 1 : vector<1x256xf32>, i32 -> vector<1x256xf32>
    %115 = vector.broadcast %7 : f32 to vector<1x256xf32>
    %116 = arith.mulf %114, %115 : vector<1x256xf32>
    %c240_i32_24 = arith.constant 240 : i32
    %117 = tpu.dynamic_rotate %43 by %c240_i32_24 dim 1 : vector<1x256xf32>, i32 -> vector<1x256xf32>
    %118 = vector.broadcast %16 : f32 to vector<1x256xf32>
    %119 = arith.mulf %117, %118 : vector<1x256xf32>
    %120 = arith.addf %116, %119 : vector<1x256xf32>
    %cst_25 = arith.constant 0.000000e+00 : f32
    %121 = vector.broadcast %cst_25 : f32 to vector<1x256xf32>
    %122 = arith.select %24, %120, %121 : vector<1x256xi1>, vector<1x256xf32>
    %123 = arith.addf %113, %122 : vector<1x256xf32>
    %c239_i32 = arith.constant 239 : i32
    %124 = tpu.dynamic_rotate %40 by %c239_i32 dim 1 : vector<1x256xf32>, i32 -> vector<1x256xf32>
    %125 = vector.broadcast %8 : f32 to vector<1x256xf32>
    %126 = arith.mulf %124, %125 : vector<1x256xf32>
    %c239_i32_26 = arith.constant 239 : i32
    %127 = tpu.dynamic_rotate %43 by %c239_i32_26 dim 1 : vector<1x256xf32>, i32 -> vector<1x256xf32>
    %128 = vector.broadcast %17 : f32 to vector<1x256xf32>
    %129 = arith.mulf %127, %128 : vector<1x256xf32>
    %130 = arith.addf %126, %129 : vector<1x256xf32>
    %131 = arith.andi %24, %28 : vector<1x256xi1>
    %cst_27 = arith.constant 0.000000e+00 : f32
    %132 = vector.broadcast %cst_27 : f32 to vector<1x256xf32>
    %133 = arith.select %131, %130, %132 : vector<1x256xi1>, vector<1x256xf32>
    %134 = arith.addf %123, %133 : vector<1x256xf32>
    %135 = vector.broadcast %18 : f32 to vector<1x256xf32>
    %136 = arith.addf %134, %135 : vector<1x256xf32>
    %137 = arith.negf %136 : vector<1x256xf32>
    %138 = math.exp %137 : vector<1x256xf32>
    %cst_28 = arith.constant 1.000000e+00 : f32
    %139 = vector.broadcast %cst_28 : f32 to vector<1x256xf32>
    %140 = arith.addf %139, %138 : vector<1x256xf32>
    %141 = arith.divf %139, %140 : vector<1x256xf32>
    %142 = vector.broadcast %141 : vector<1x256xf32> to vector<4x256xf32>
    %143 = arith.mulf %30, %142 : vector<4x256xf32>
    %c0_29 = arith.constant 0 : index
    %c0_30 = arith.constant 0 : index
    %c0_31 = arith.constant 0 : index
    %144 = vector.load %arg5[%c0_29, %c0_30, %c0_31] : memref<2x4x256xf32, #tpu.memory_space<vmem>>, vector<1x4x256xf32>
    %145 = vector.shape_cast %144 : vector<1x4x256xf32> to vector<4x256xf32>
    %146 = vector.shape_cast %143 : vector<4x256xf32> to vector<1x4x256xf32>
    tpu.vector_store %arg5[%c0_29, %c0_30, %c0_31], %146 {strides = array<i32>} : memref<2x4x256xf32, #tpu.memory_space<vmem>>, vector<1x4x256xf32>,
    %c1_32 = arith.constant 1 : index
    %c0_33 = arith.constant 0 : index
    %c0_34 = arith.constant 0 : index
    %147 = vector.load %arg4[%c1_32, %c0_33, %c0_34] : memref<2x4x256xf32, #tpu.memory_space<vmem>>, vector<1x4x256xf32>
    %148 = vector.shape_cast %147 : vector<1x4x256xf32> to vector<4x256xf32>
    %149 = vector.extract_strided_slice %148 {offsets = [0, 0], sizes = [1, 256], strides = [1, 1]} : vector<4x256xf32> to vector<1x256xf32>
    %150 = vector.extract_strided_slice %148 {offsets = [0, 0], sizes = [1, 256], strides = [1, 1]} : vector<4x256xf32> to vector<1x256xf32>
    %151 = vector.extract_strided_slice %148 {offsets = [1, 0], sizes = [1, 256], strides = [1, 1]} : vector<4x256xf32> to vector<1x256xf32>
    %152 = arith.maximumf %149, %151 : vector<1x256xf32>
    %153 = arith.addf %150, %151 : vector<1x256xf32>
    %154 = vector.extract_strided_slice %148 {offsets = [2, 0], sizes = [1, 256], strides = [1, 1]} : vector<4x256xf32> to vector<1x256xf32>
    %155 = arith.maximumf %152, %154 : vector<1x256xf32>
    %156 = arith.addf %153, %154 : vector<1x256xf32>
    %157 = vector.extract_strided_slice %148 {offsets = [3, 0], sizes = [1, 256], strides = [1, 1]} : vector<4x256xf32> to vector<1x256xf32>
    %158 = arith.maximumf %155, %157 : vector<1x256xf32>
    %159 = arith.addf %156, %157 : vector<1x256xf32>
    %cst_35 = arith.constant 2.500000e-01 : f32
    %160 = vector.broadcast %cst_35 : f32 to vector<1x256xf32>
    %161 = arith.mulf %159, %160 : vector<1x256xf32>
    %cst_36 = arith.constant 0.000000e+00 : f32
    %162 = vector.broadcast %cst_36 : f32 to vector<1x256xf32>
    %c17_i32_37 = arith.constant 17 : i32
    %163 = tpu.dynamic_rotate %158 by %c17_i32_37 dim 1 : vector<1x256xf32>, i32 -> vector<1x256xf32>
    %164 = vector.broadcast %0 : f32 to vector<1x256xf32>
    %165 = arith.mulf %163, %164 : vector<1x256xf32>
    %c17_i32_38 = arith.constant 17 : i32
    %166 = tpu.dynamic_rotate %161 by %c17_i32_38 dim 1 : vector<1x256xf32>, i32 -> vector<1x256xf32>
    %167 = vector.broadcast %9 : f32 to vector<1x256xf32>
    %168 = arith.mulf %166, %167 : vector<1x256xf32>
    %169 = arith.addf %165, %168 : vector<1x256xf32>
    %170 = arith.andi %22, %26 : vector<1x256xi1>
    %cst_39 = arith.constant 0.000000e+00 : f32
    %171 = vector.broadcast %cst_39 : f32 to vector<1x256xf32>
    %172 = arith.select %170, %169, %171 : vector<1x256xi1>, vector<1x256xf32>
    %173 = arith.addf %162, %172 : vector<1x256xf32>
    %c16_i32_40 = arith.constant 16 : i32
    %174 = tpu.dynamic_rotate %158 by %c16_i32_40 dim 1 : vector<1x256xf32>, i32 -> vector<1x256xf32>
    %175 = vector.broadcast %1 : f32 to vector<1x256xf32>
    %176 = arith.mulf %174, %175 : vector<1x256xf32>
    %c16_i32_41 = arith.constant 16 : i32
    %177 = tpu.dynamic_rotate %161 by %c16_i32_41 dim 1 : vector<1x256xf32>, i32 -> vector<1x256xf32>
    %178 = vector.broadcast %10 : f32 to vector<1x256xf32>
    %179 = arith.mulf %177, %178 : vector<1x256xf32>
    %180 = arith.addf %176, %179 : vector<1x256xf32>
    %cst_42 = arith.constant 0.000000e+00 : f32
    %181 = vector.broadcast %cst_42 : f32 to vector<1x256xf32>
    %182 = arith.select %22, %180, %181 : vector<1x256xi1>, vector<1x256xf32>
    %183 = arith.addf %173, %182 : vector<1x256xf32>
    %c15_i32_43 = arith.constant 15 : i32
    %184 = tpu.dynamic_rotate %158 by %c15_i32_43 dim 1 : vector<1x256xf32>, i32 -> vector<1x256xf32>
    %185 = vector.broadcast %2 : f32 to vector<1x256xf32>
    %186 = arith.mulf %184, %185 : vector<1x256xf32>
    %c15_i32_44 = arith.constant 15 : i32
    %187 = tpu.dynamic_rotate %161 by %c15_i32_44 dim 1 : vector<1x256xf32>, i32 -> vector<1x256xf32>
    %188 = vector.broadcast %11 : f32 to vector<1x256xf32>
    %189 = arith.mulf %187, %188 : vector<1x256xf32>
    %190 = arith.addf %186, %189 : vector<1x256xf32>
    %191 = arith.andi %22, %28 : vector<1x256xi1>
    %cst_45 = arith.constant 0.000000e+00 : f32
    %192 = vector.broadcast %cst_45 : f32 to vector<1x256xf32>
    %193 = arith.select %191, %190, %192 : vector<1x256xi1>, vector<1x256xf32>
    %194 = arith.addf %183, %193 : vector<1x256xf32>
    %c1_i32_46 = arith.constant 1 : i32
    %195 = tpu.dynamic_rotate %158 by %c1_i32_46 dim 1 : vector<1x256xf32>, i32 -> vector<1x256xf32>
    %196 = vector.broadcast %3 : f32 to vector<1x256xf32>
    %197 = arith.mulf %195, %196 : vector<1x256xf32>
    %c1_i32_47 = arith.constant 1 : i32
    %198 = tpu.dynamic_rotate %161 by %c1_i32_47 dim 1 : vector<1x256xf32>, i32 -> vector<1x256xf32>
    %199 = vector.broadcast %12 : f32 to vector<1x256xf32>
    %200 = arith.mulf %198, %199 : vector<1x256xf32>
    %201 = arith.addf %197, %200 : vector<1x256xf32>
    %cst_48 = arith.constant 0.000000e+00 : f32
    %202 = vector.broadcast %cst_48 : f32 to vector<1x256xf32>
    %203 = arith.select %26, %201, %202 : vector<1x256xi1>, vector<1x256xf32>
    %204 = arith.addf %194, %203 : vector<1x256xf32>
    %205 = vector.broadcast %4 : f32 to vector<1x256xf32>
    %206 = arith.mulf %158, %205 : vector<1x256xf32>
    %207 = vector.broadcast %13 : f32 to vector<1x256xf32>
    %208 = arith.mulf %161, %207 : vector<1x256xf32>
    %209 = arith.addf %206, %208 : vector<1x256xf32>
    %210 = arith.addf %204, %209 : vector<1x256xf32>
    %c255_i32_49 = arith.constant 255 : i32
    %211 = tpu.dynamic_rotate %158 by %c255_i32_49 dim 1 : vector<1x256xf32>, i32 -> vector<1x256xf32>
    %212 = vector.broadcast %5 : f32 to vector<1x256xf32>
    %213 = arith.mulf %211, %212 : vector<1x256xf32>
    %c255_i32_50 = arith.constant 255 : i32
    %214 = tpu.dynamic_rotate %161 by %c255_i32_50 dim 1 : vector<1x256xf32>, i32 -> vector<1x256xf32>
    %215 = vector.broadcast %14 : f32 to vector<1x256xf32>
    %216 = arith.mulf %214, %215 : vector<1x256xf32>
    %217 = arith.addf %213, %216 : vector<1x256xf32>
    %cst_51 = arith.constant 0.000000e+00 : f32
    %218 = vector.broadcast %cst_51 : f32 to vector<1x256xf32>
    %219 = arith.select %28, %217, %218 : vector<1x256xi1>, vector<1x256xf32>
    %220 = arith.addf %210, %219 : vector<1x256xf32>
    %c241_i32_52 = arith.constant 241 : i32
    %221 = tpu.dynamic_rotate %158 by %c241_i32_52 dim 1 : vector<1x256xf32>, i32 -> vector<1x256xf32>
    %222 = vector.broadcast %6 : f32 to vector<1x256xf32>
    %223 = arith.mulf %221, %222 : vector<1x256xf32>
    %c241_i32_53 = arith.constant 241 : i32
    %224 = tpu.dynamic_rotate %161 by %c241_i32_53 dim 1 : vector<1x256xf32>, i32 -> vector<1x256xf32>
    %225 = vector.broadcast %15 : f32 to vector<1x256xf32>
    %226 = arith.mulf %224, %225 : vector<1x256xf32>
    %227 = arith.addf %223, %226 : vector<1x256xf32>
    %228 = arith.andi %24, %26 : vector<1x256xi1>
    %cst_54 = arith.constant 0.000000e+00 : f32
    %229 = vector.broadcast %cst_54 : f32 to vector<1x256xf32>
    %230 = arith.select %228, %227, %229 : vector<1x256xi1>, vector<1x256xf32>
    %231 = arith.addf %220, %230 : vector<1x256xf32>
    %c240_i32_55 = arith.constant 240 : i32
    %232 = tpu.dynamic_rotate %158 by %c240_i32_55 dim 1 : vector<1x256xf32>, i32 -> vector<1x256xf32>
    %233 = vector.broadcast %7 : f32 to vector<1x256xf32>
    %234 = arith.mulf %232, %233 : vector<1x256xf32>
    %c240_i32_56 = arith.constant 240 : i32
    %235 = tpu.dynamic_rotate %161 by %c240_i32_56 dim 1 : vector<1x256xf32>, i32 -> vector<1x256xf32>
    %236 = vector.broadcast %16 : f32 to vector<1x256xf32>
    %237 = arith.mulf %235, %236 : vector<1x256xf32>
    %238 = arith.addf %234, %237 : vector<1x256xf32>
    %cst_57 = arith.constant 0.000000e+00 : f32
    %239 = vector.broadcast %cst_57 : f32 to vector<1x256xf32>
    %240 = arith.select %24, %238, %239 : vector<1x256xi1>, vector<1x256xf32>
    %241 = arith.addf %231, %240 : vector<1x256xf32>
    %c239_i32_58 = arith.constant 239 : i32
    %242 = tpu.dynamic_rotate %158 by %c239_i32_58 dim 1 : vector<1x256xf32>, i32 -> vector<1x256xf32>
    %243 = vector.broadcast %8 : f32 to vector<1x256xf32>
    %244 = arith.mulf %242, %243 : vector<1x256xf32>
    %c239_i32_59 = arith.constant 239 : i32
    %245 = tpu.dynamic_rotate %161 by %c239_i32_59 dim 1 : vector<1x256xf32>, i32 -> vector<1x256xf32>
    %246 = vector.broadcast %17 : f32 to vector<1x256xf32>
    %247 = arith.mulf %245, %246 : vector<1x256xf32>
    %248 = arith.addf %244, %247 : vector<1x256xf32>
    %249 = arith.andi %24, %28 : vector<1x256xi1>
    %cst_60 = arith.constant 0.000000e+00 : f32
    %250 = vector.broadcast %cst_60 : f32 to vector<1x256xf32>
    %251 = arith.select %249, %248, %250 : vector<1x256xi1>, vector<1x256xf32>
    %252 = arith.addf %241, %251 : vector<1x256xf32>
    %253 = vector.broadcast %18 : f32 to vector<1x256xf32>
    %254 = arith.addf %252, %253 : vector<1x256xf32>
    %255 = arith.negf %254 : vector<1x256xf32>
    %256 = math.exp %255 : vector<1x256xf32>
    %cst_61 = arith.constant 1.000000e+00 : f32
    %257 = vector.broadcast %cst_61 : f32 to vector<1x256xf32>
    %258 = arith.addf %257, %256 : vector<1x256xf32>
    %259 = arith.divf %257, %258 : vector<1x256xf32>
    %260 = vector.broadcast %259 : vector<1x256xf32> to vector<4x256xf32>
    %261 = arith.mulf %148, %260 : vector<4x256xf32>
    %c1_62 = arith.constant 1 : index
    %c0_63 = arith.constant 0 : index
    %c0_64 = arith.constant 0 : index
    %262 = vector.load %arg5[%c1_62, %c0_63, %c0_64] : memref<2x4x256xf32, #tpu.memory_space<vmem>>, vector<1x4x256xf32>
    %263 = vector.shape_cast %262 : vector<1x4x256xf32> to vector<4x256xf32>
    %264 = vector.shape_cast %261 : vector<4x256xf32> to vector<1x4x256xf32>
    tpu.vector_store %arg5[%c1_62, %c0_63, %c0_64], %264 {strides = array<i32>} : memref<2x4x256xf32, #tpu.memory_space<vmem>>, vector<1x4x256xf32>,
    return
  }
  func.func @transform_0(%arg0: i32) -> i32 {
    %c0_i32 = arith.constant 0 : i32
    %c0_i32_0 = arith.constant 0 : i32
    return %c0_i32 : i32
  }
  func.func @transform_1(%arg0: i32) -> i32 {
    %c0_i32 = arith.constant 0 : i32
    %c0_i32_0 = arith.constant 0 : i32
    return %c0_i32 : i32
  }
  func.func @transform_2(%arg0: i32) -> (i32, i32) {
    %c0_i32 = arith.constant 0 : i32
    %c0_i32_0 = arith.constant 0 : i32
    %c0_i32_1 = arith.constant 0 : i32
    return %c0_i32, %c0_i32_0 : i32, i32
  }
  func.func @transform_3(%arg0: i32) -> (i32, i32, i32) {
    %c0_i32 = arith.constant 0 : i32
    %c0_i32_0 = arith.constant 0 : i32
    %c0_i32_1 = arith.constant 0 : i32
    return %arg0, %c0_i32, %c0_i32_0 : i32, i32, i32
  }
  func.func @transform_4(%arg0: i32) -> (i32, i32, i32) {
    %c0_i32 = arith.constant 0 : i32
    %c0_i32_0 = arith.constant 0 : i32
    %c0_i32_1 = arith.constant 0 : i32
    return %arg0, %c0_i32, %c0_i32_0 : i32, i32, i32
  }
}

</mosaic_0001>

<llo_original>
// kernel: tpu_custom_call.1
$region0: #{tpu_custom_call.1}
  #allocation0 [shape = 'u32[]', space=smem, size = 0x4, offset = 0x4, fixed_abs, tag = 'smem constant byte address 0x4 - core index']
  #allocation1 [shape = 'u32[144,128]{1,0:T(1,128)}', space=vmem, size = 0x12000, scoped, tag = 'internal scratch']
  #allocation2 [shape = 'f32[1]{0:T(128)S(6)}', space=smem, size = 0x200, scoped, tag = 'scoped memory for tpu_custom_call.1']
  %s0 = inlined_call_operand.vmem [shape: f32[18], index: 0, kind: input, shape index: {}]
  %s1 = inlined_call_operand.<no memory space> [shape: f32[1], index: 1, kind: input, shape index: {}]
  %s2 = inlined_call_operand.vmem [shape: s32[2,256], index: 2, kind: input, shape index: {}]
  %s3 = inlined_call_operand.hbm [shape: f32[2,4,256], index: 3, kind: input, shape index: {}]
  %s4 = inlined_call_operand.hbm [shape: f32[2,4,256], index: 4, kind: output, shape index: {}]
  %s5 = sld [smem:[#allocation0]]
  $region34: #{tpu_custom_call.1} parent=0
    _
  %s7 = ssub.s32 1, %s5
  %s8 = scalar_select 0, %s7, %s5
  %9 = sst [smem:[#allocation2]] %s1
  $region1: #{tpu_custom_call.1} parent=0
    #allocation3 [shape = 'u8[512]{0}', space=smem, size = 0x200, scoped, tag = 'input window, operand 0, single buffered']
    #allocation4 [shape = 's32[1]{0}', space=sflag, size = 0x4, scoped, tag = 'scoped memory for tpu_custom_call.1']
    #allocation5 [shape = 's32[1]{0}', space=sflag, size = 0x4, scoped, tag = 'scoped memory for tpu_custom_call.1']
    #allocation6 [shape = 's32[1]{0}', space=sflag, size = 0x4, scoped, tag = 'scoped memory for tpu_custom_call.1']
    #allocation7 [shape = 'u8[8192]{0}', space=vmem, size = 0x2000, scoped, tag = 'input window, operand 3, single buffered']
    #allocation8 [shape = 'u8[8192]{0}', space=vmem, size = 0x2000, scoped, tag = 'output window, operand 0, single buffered']
    %10 = vsyncpa [#allocation6], 0
    %11 = vsyncpa [#allocation4], 0
    %12 = vsyncpa [#allocation5], 0
    // Predicated region
    $region2: #{tpu_custom_call.1} parent=1 // pred_check
      _
    $region3: #{tpu_custom_call.1} parent=1 // pred_check_branch
      %14 = sbr.rel (0) target = $region5
    $region4: #{tpu_custom_call.1} parent=1 // pred_region
      %s16 = ssub.s32 16, 16
      %17 = vsyncadd [#allocation6], %s16
      %s19 = sshll.u32 %s0, 4
      %s20 = int_to_ptr.vmem [resolvable:$true] %s19
      %22 = dma.vmem_to_smem %s20, 16, [#allocation3], [#allocation6]
    $region5: #{tpu_custom_call.1} parent=1 // pred_fallthru
      _
    // Predicated region
    $region6: #{tpu_custom_call.1} parent=1 // pred_check
      _
    $region7: #{tpu_custom_call.1} parent=1 // pred_check_branch
      %24 = sbr.rel (0) target = $region9
    $region8: #{tpu_custom_call.1} parent=1 // pred_region
      _
    $region9: #{tpu_custom_call.1} parent=1 // pred_fallthru
      _
    // Predicated region
    $region10: #{tpu_custom_call.1} parent=1 // pred_check
      _
    $region11: #{tpu_custom_call.1} parent=1 // pred_check_branch
      %26 = sbr.rel (0) target = $region13
    $region12: #{tpu_custom_call.1} parent=1 // pred_region
      _
    $region13: #{tpu_custom_call.1} parent=1 // pred_fallthru
      _
    // Predicated region
    $region14: #{tpu_custom_call.1} parent=1 // pred_check
      _
    $region15: #{tpu_custom_call.1} parent=1 // pred_check_branch
      %28 = sbr.rel (0) target = $region17
    $region16: #{tpu_custom_call.1} parent=1 // pred_region
      %s30 = ssub.s32 256, 256
      %31 = vsyncadd [#allocation4], %s30
      %s32 = sshll.u32 [#allocation7], 4
      %s33 = int_to_ptr.vmem [resolvable:$true] %s32
      %38 = dma.hbm_to_vmem [thread:$0]  %s3, 256, %s33, [#allocation4], 128, 128, 8
    $region17: #{tpu_custom_call.1} parent=1 // pred_fallthru
      _
    // Predicated region
    $region18: #{tpu_custom_call.1} parent=1 // pred_check
      _
    $region19: #{tpu_custom_call.1} parent=1 // pred_check_branch
      %40 = sbr.rel (0) target = $region21
    $region20: #{tpu_custom_call.1} parent=1 // pred_region
      %41 = dma.done [#allocation6], 16
    $region21: #{tpu_custom_call.1} parent=1 // pred_fallthru
      _
    // Predicated region
    $region22: #{tpu_custom_call.1} parent=1 // pred_check
      _
    $region23: #{tpu_custom_call.1} parent=1 // pred_check_branch
      %43 = sbr.rel (0) target = $region25
    $region24: #{tpu_custom_call.1} parent=1 // pred_region
      %44 = dma.done [#allocation4], 256
    $region25: #{tpu_custom_call.1} parent=1 // pred_fallthru
      _
    %45 = sfence
    %s46 = sld [smem:[#allocation3]]
    %s47 = sld [smem:[#allocation3 + $0x1]]
    %s48 = sld [smem:[#allocation3 + $0x2]]
    %s49 = sld [smem:[#allocation3 + $0x3]]
    %s50 = sld [smem:[#allocation3 + $0x4]]
    %s51 = sld [smem:[#allocation3 + $0x5]]
    %s52 = sld [smem:[#allocation3 + $0x6]]
    %s53 = sld [smem:[#allocation3 + $0x7]]
    %s54 = sld [smem:[#allocation3 + $0x8]]
    %s55 = sld [smem:[#allocation3 + $0x9]]
    %s56 = sld [smem:[#allocation3 + $0xa]]
    %s57 = sld [smem:[#allocation3 + $0xb]]
    %s58 = sld [smem:[#allocation3 + $0xc]]
    %s59 = sld [smem:[#allocation3 + $0xd]]
    %s60 = sld [smem:[#allocation3 + $0xe]]
    %s61 = sld [smem:[#allocation3 + $0xf]]
    %s62 = sld [smem:[#allocation3 + $0x10]]
    %s63 = sld [smem:[#allocation3 + $0x11]]
    %s64 = sld [smem:[#allocation2]]
    %v65 = vld [vmem:[%s2] ss:$2 sm:$0x3]
    %s66 = scalar_lea.vmem %s2, 1
    %v67 = vld [vmem:[%s66] ss:$2 sm:$0x3]
    %vm68 = vcmp.ge.s32.totalorder %v65, 16
    %vm69 = vcmp.lt.s32.totalorder %v65, 240
    %vm70 = vcmp.ge.s32.totalorder %v67, 1
    %vm71 = vcmp.le.s32.totalorder %v67, 14
    %v72 = vld [vmem:[#allocation7] sm:$0xff]
    %v74 = vrot.slane %v72, 5
    %v75 = vrot.slane %v74, 4
    %v77 = vmax.f32 %v72, %v75
    %v78 = vadd.f32 %v72, %v75
    %v79 = vrot.slane %v72, 6
    %v80 = vrot.slane %v79, 4
    %v82 = vmax.f32 %v77, %v80
    %v83 = vadd.f32 %v78, %v80
    %v84 = vrot.slane %v72, 7
    %v85 = vrot.slane %v84, 4
    %v87 = vmax.f32 %v82, %v85
    %v88 = vadd.f32 %v83, %v85
    %v89 = vmul.f32 %v88, 0.25
    %v91 = vlaneseq
    %v92 = vshrl.u32 %v91, 7
    %v93 = vsub.s32 0, %v92
    %v94 = vrot.slane %v87, %v93
    %v95 = vlaneseq
    %v96 = vshrl.u32 %v95, 7
    %v97 = vsub.s32 4, %v96
    %v98 = vrot.slane %v87, %v97
    %101 = vrot.lane.b32.xlu0 %v94, 17
    %v102 = vpop.permute.xlu0 %101
    %103 = vrot.lane.b32.xlu0 %v98, 17
    %v104 = vpop.permute.xlu0 %103
    %v105 = vlaneseq
    %v106 = vand.u32 %v105, 127
    %vm107 = vcmp.lt.s32.totalorder %v106, 17
    %v108 = vsel %vm107, %v102, %v104
    %v109 = vsel %vm107, %v104, %v102
    %v110 = vstv %s46
    %v111 = vmul.f32 %v109, %v110
    %v112 = vmul.f32 %v108, %v110
    %v114 = vlaneseq
    %v115 = vshrl.u32 %v114, 7
    %v116 = vsub.s32 0, %v115
    %v117 = vrot.slane %v89, %v116
    %v118 = vlaneseq
    %v119 = vshrl.u32 %v118, 7
    %v120 = vsub.s32 4, %v119
    %v121 = vrot.slane %v89, %v120
    %124 = vrot.lane.b32.xlu0 %v117, 17
    %v125 = vpop.permute.xlu0 %124
    %126 = vrot.lane.b32.xlu0 %v121, 17
    %v127 = vpop.permute.xlu0 %126
    %v128 = vsel %vm107, %v125, %v127
    %v129 = vsel %vm107, %v127, %v125
    %v130 = vstv %s55
    %v131 = vmul.f32 %v129, %v130
    %v132 = vmul.f32 %v128, %v130
    %v133 = vadd.f32 %v111, %v131
    %v134 = vadd.f32 %v112, %v132
    %vm135 = vmand %vm68, %vm70
    %v138 = vcombine.low %v133, %v134
    %v140 = vunpack.c.l.s4 1966171168
    %v141 = vunpack.c.0.s8 %v140
    %v142 = vlaneseq
    %v143 = vshrl.u32 %v142, 7
    %v144 = vsub.s32 %v141, %v143
    %v145 = vrot.slane %v138, %v144
    %v147 = vunpack.c.l.s4 1966171168
    %v148 = vunpack.c.0.s8 %v147
    %v149 = vlaneseq
    %v150 = vshrl.u32 %v149, 7
    %v151 = vsub.s32 %v148, %v150
    %v152 = vrot.slane %v145, %v151
    %v154 = vsel %vm135, %v152, 0.0
    %v155 = vadd.f32 %v154, 0.0
    %156 = vrot.lane.b32.xlu0 %v94, 16
    %v157 = vpop.permute.xlu0 %156
    %158 = vrot.lane.b32.xlu0 %v98, 16
    %v159 = vpop.permute.xlu0 %158
    %vm160 = vcmp.lt.s32.totalorder %v106, 16
    %v161 = vsel %vm160, %v157, %v159
    %v162 = vsel %vm160, %v159, %v157
    %v163 = vstv %s47
    %v164 = vmul.f32 %v162, %v163
    %v165 = vmul.f32 %v161, %v163
    %166 = vrot.lane.b32.xlu0 %v117, 16
    %v167 = vpop.permute.xlu0 %166
    %168 = vrot.lane.b32.xlu0 %v121, 16
    %v169 = vpop.permute.xlu0 %168
    %v170 = vsel %vm160, %v167, %v169
    %v171 = vsel %vm160, %v169, %v167
    %v172 = vstv %s56
    %v173 = vmul.f32 %v171, %v172
    %v174 = vmul.f32 %v170, %v172
    %v175 = vadd.f32 %v164, %v173
    %v176 = vadd.f32 %v165, %v174
    %v179 = vcombine.low %v175, %v176
    %v181 = vunpack.c.l.s4 1966171168
    %v182 = vunpack.c.0.s8 %v181
    %v183 = vlaneseq
    %v184 = vshrl.u32 %v183, 7
    %v185 = vsub.s32 %v182, %v184
    %v186 = vrot.slane %v179, %v185
    %v188 = vunpack.c.l.s4 1966171168
    %v189 = vunpack.c.0.s8 %v188
    %v190 = vlaneseq
    %v191 = vshrl.u32 %v190, 7
    %v192 = vsub.s32 %v189, %v191
    %v193 = vrot.slane %v186, %v192
    %v195 = vsel %vm68, %v193, 0.0
    %v196 = vadd.f32 %v155, %v195
    %197 = vrot.lane.b32.xlu0 %v94, 15
    %v198 = vpop.permute.xlu0 %197
    %199 = vrot.lane.b32.xlu0 %v98, 15
    %v200 = vpop.permute.xlu0 %199
    %vm201 = vcmp.lt.s32.totalorder %v106, 15
    %v202 = vsel %vm201, %v198, %v200
    %v203 = vsel %vm201, %v200, %v198
    %v204 = vstv %s48
    %v205 = vmul.f32 %v203, %v204
    %v206 = vmul.f32 %v202, %v204
    %207 = vrot.lane.b32.xlu0 %v117, 15
    %v208 = vpop.permute.xlu0 %207
    %209 = vrot.lane.b32.xlu0 %v121, 15
    %v210 = vpop.permute.xlu0 %209
    %v211 = vsel %vm201, %v208, %v210
    %v212 = vsel %vm201, %v210, %v208
    %v213 = vstv %s57
    %v214 = vmul.f32 %v212, %v213
    %v215 = vmul.f32 %v211, %v213
    %v216 = vadd.f32 %v205, %v214
    %v217 = vadd.f32 %v206, %v215
    %vm218 = vmand %vm68, %vm71
    %v221 = vcombine.low %v216, %v217
    %v223 = vunpack.c.l.s4 1966171168
    %v224 = vunpack.c.0.s8 %v223
    %v225 = vlaneseq
    %v226 = vshrl.u32 %v225, 7
    %v227 = vsub.s32 %v224, %v226
    %v228 = vrot.slane %v221, %v227
    %v230 = vunpack.c.l.s4 1966171168
    %v231 = vunpack.c.0.s8 %v230
    %v232 = vlaneseq
    %v233 = vshrl.u32 %v232, 7
    %v234 = vsub.s32 %v231, %v233
    %v235 = vrot.slane %v228, %v234
    %v237 = vsel %vm218, %v235, 0.0
    %v238 = vadd.f32 %v196, %v237
    %239 = vrot.lane.b32.xlu0 %v94, 1
    %v240 = vpop.permute.xlu0 %239
    %241 = vrot.lane.b32.xlu0 %v98, 1
    %v242 = vpop.permute.xlu0 %241
    %vm243 = vcmp.lt.s32.totalorder %v106, 1
    %v244 = vsel %vm243, %v240, %v242
    %v245 = vsel %vm243, %v242, %v240
    %v246 = vstv %s49
    %v247 = vmul.f32 %v245, %v246
    %v248 = vmul.f32 %v244, %v246
    %249 = vrot.lane.b32.xlu0 %v117, 1
    %v250 = vpop.permute.xlu0 %249
    %251 = vrot.lane.b32.xlu0 %v121, 1
    %v252 = vpop.permute.xlu0 %251
    %v253 = vsel %vm243, %v250, %v252
    %v254 = vsel %vm243, %v252, %v250
    %v255 = vstv %s58
    %v256 = vmul.f32 %v254, %v255
    %v257 = vmul.f32 %v253, %v255
    %v258 = vadd.f32 %v247, %v256
    %v259 = vadd.f32 %v248, %v257
    %v262 = vcombine.low %v258, %v259
    %v264 = vunpack.c.l.s4 1966171168
    %v265 = vunpack.c.0.s8 %v264
    %v266 = vlaneseq
    %v267 = vshrl.u32 %v266, 7
    %v268 = vsub.s32 %v265, %v267
    %v269 = vrot.slane %v262, %v268
    %v271 = vunpack.c.l.s4 1966171168
    %v272 = vunpack.c.0.s8 %v271
    %v273 = vlaneseq
    %v274 = vshrl.u32 %v273, 7
    %v275 = vsub.s32 %v272, %v274
    %v276 = vrot.slane %v269, %v275
    %v278 = vsel %vm70, %v276, 0.0
    %v279 = vadd.f32 %v238, %v278
    %v280 = vstv %s50
    %v281 = vmul.f32 %v87, %v280
    %v282 = vstv %s59
    %v283 = vmul.f32 %v89, %v282
    %v284 = vadd.f32 %v281, %v283
    %v287 = vunpack.c.l.s4 1966171168
    %v288 = vunpack.c.0.s8 %v287
    %v289 = vlaneseq
    %v290 = vshrl.u32 %v289, 7
    %v291 = vsub.s32 %v288, %v290
    %v292 = vrot.slane %v284, %v291
    %v294 = vunpack.c.l.s4 1966171168
    %v295 = vunpack.c.0.s8 %v294
    %v296 = vlaneseq
    %v297 = vshrl.u32 %v296, 7
    %v298 = vsub.s32 %v295, %v297
    %v299 = vrot.slane %v292, %v298
    %v301 = vadd.f32 %v279, %v299
    %302 = vrot.lane.b32.xlu0 %v94, 127
    %v303 = vpop.permute.xlu0 %302
    %304 = vrot.lane.b32.xlu0 %v98, 127
    %v305 = vpop.permute.xlu0 %304
    %vm306 = vcmp.lt.s32.totalorder %v106, 127
    %v307 = vsel %vm306, %v303, %v305
    %v308 = vsel %vm306, %v305, %v303
    %v309 = vstv %s51
    %v310 = vmul.f32 %v307, %v309
    %v311 = vmul.f32 %v308, %v309
    %312 = vrot.lane.b32.xlu0 %v117, 127
    %v313 = vpop.permute.xlu0 %312
    %314 = vrot.lane.b32.xlu0 %v121, 127
    %v315 = vpop.permute.xlu0 %314
    %v316 = vsel %vm306, %v313, %v315
    %v317 = vsel %vm306, %v315, %v313
    %v318 = vstv %s60
    %v319 = vmul.f32 %v316, %v318
    %v320 = vmul.f32 %v317, %v318
    %v321 = vadd.f32 %v310, %v319
    %v322 = vadd.f32 %v311, %v320
    %v325 = vcombine.low %v321, %v322
    %v327 = vunpack.c.l.s4 1966171168
    %v328 = vunpack.c.0.s8 %v327
    %v329 = vlaneseq
    %v330 = vshrl.u32 %v329, 7
    %v331 = vsub.s32 %v328, %v330
    %v332 = vrot.slane %v325, %v331
    %v334 = vunpack.c.l.s4 1966171168
    %v335 = vunpack.c.0.s8 %v334
    %v336 = vlaneseq
    %v337 = vshrl.u32 %v336, 7
    %v338 = vsub.s32 %v335, %v337
    %v339 = vrot.slane %v332, %v338
    %v341 = vsel %vm71, %v339, 0.0
    %v342 = vadd.f32 %v301, %v341
    %343 = vrot.lane.b32.xlu0 %v94, 113
    %v344 = vpop.permute.xlu0 %343
    %345 = vrot.lane.b32.xlu0 %v98, 113
    %v346 = vpop.permute.xlu0 %345
    %vm347 = vcmp.lt.s32.totalorder %v106, 113
    %v348 = vsel %vm347, %v344, %v346
    %v349 = vsel %vm347, %v346, %v344
    %v350 = vstv %s52
    %v351 = vmul.f32 %v348, %v350
    %v352 = vmul.f32 %v349, %v350
    %353 = vrot.lane.b32.xlu0 %v117, 113
    %v354 = vpop.permute.xlu0 %353
    %355 = vrot.lane.b32.xlu0 %v121, 113
    %v356 = vpop.permute.xlu0 %355
    %v357 = vsel %vm347, %v354, %v356
    %v358 = vsel %vm347, %v356, %v354
    %v359 = vstv %s61
    %v360 = vmul.f32 %v357, %v359
    %v361 = vmul.f32 %v358, %v359
    %v362 = vadd.f32 %v351, %v360
    %v363 = vadd.f32 %v352, %v361
    %vm364 = vmand %vm69, %vm70
    %v367 = vcombine.low %v362, %v363
    %v369 = vunpack.c.l.s4 1966171168
    %v370 = vunpack.c.0.s8 %v369
    %v371 = vlaneseq
    %v372 = vshrl.u32 %v371, 7
    %v373 = vsub.s32 %v370, %v372
    %v374 = vrot.slane %v367, %v373
    %v376 = vunpack.c.l.s4 1966171168
    %v377 = vunpack.c.0.s8 %v376
    %v378 = vlaneseq
    %v379 = vshrl.u32 %v378, 7
    %v380 = vsub.s32 %v377, %v379
    %v381 = vrot.slane %v374, %v380
    %v383 = vsel %vm364, %v381, 0.0
    %v384 = vadd.f32 %v342, %v383
    %385 = vrot.lane.b32.xlu0 %v94, 112
    %v386 = vpop.permute.xlu0 %385
    %387 = vrot.lane.b32.xlu0 %v98, 112
    %v388 = vpop.permute.xlu0 %387
    %vm389 = vcmp.lt.s32.totalorder %v106, 112
    %v390 = vsel %vm389, %v386, %v388
    %v391 = vsel %vm389, %v388, %v386
    %v392 = vstv %s53
    %v393 = vmul.f32 %v390, %v392
    %v394 = vmul.f32 %v391, %v392
    %395 = vrot.lane.b32.xlu0 %v117, 112
    %v396 = vpop.permute.xlu0 %395
    %397 = vrot.lane.b32.xlu0 %v121, 112
    %v398 = vpop.permute.xlu0 %397
    %v399 = vsel %vm389, %v396, %v398
    %v400 = vsel %vm389, %v398, %v396
    %v401 = vstv %s62
    %v402 = vmul.f32 %v399, %v401
    %v403 = vmul.f32 %v400, %v401
    %v404 = vadd.f32 %v393, %v402
    %v405 = vadd.f32 %v394, %v403
    %v408 = vcombine.low %v404, %v405
    %v410 = vunpack.c.l.s4 1966171168
    %v411 = vunpack.c.0.s8 %v410
    %v412 = vlaneseq
    %v413 = vshrl.u32 %v412, 7
    %v414 = vsub.s32 %v411, %v413
    %v415 = vrot.slane %v408, %v414
    %v417 = vunpack.c.l.s4 1966171168
    %v418 = vunpack.c.0.s8 %v417
    %v419 = vlaneseq
    %v420 = vshrl.u32 %v419, 7
    %v421 = vsub.s32 %v418, %v420
    %v422 = vrot.slane %v415, %v421
    %v424 = vsel %vm69, %v422, 0.0
    %v425 = vadd.f32 %v384, %v424
    %426 = vrot.lane.b32.xlu0 %v94, 111
    %v427 = vpop.permute.xlu0 %426
    %428 = vrot.lane.b32.xlu0 %v98, 111
    %v429 = vpop.permute.xlu0 %428
    %vm430 = vcmp.lt.s32.totalorder %v106, 111
    %v431 = vsel %vm430, %v427, %v429
    %v432 = vsel %vm430, %v429, %v427
    %v433 = vstv %s54
    %v434 = vmul.f32 %v431, %v433
    %v435 = vmul.f32 %v432, %v433
    %436 = vrot.lane.b32.xlu0 %v117, 111
    %v437 = vpop.permute.xlu0 %436
    %438 = vrot.lane.b32.xlu0 %v121, 111
    %v439 = vpop.permute.xlu0 %438
    %v440 = vsel %vm430, %v437, %v439
    %v441 = vsel %vm430, %v439, %v437
    %v442 = vstv %s63
    %v443 = vmul.f32 %v440, %v442
    %v444 = vmul.f32 %v441, %v442
    %v445 = vadd.f32 %v434, %v443
    %v446 = vadd.f32 %v435, %v444
    %vm447 = vmand %vm69, %vm71
    %v450 = vcombine.low %v445, %v446
    %v452 = vunpack.c.l.s4 1966171168
    %v453 = vunpack.c.0.s8 %v452
    %v454 = vlaneseq
    %v455 = vshrl.u32 %v454, 7
    %v456 = vsub.s32 %v453, %v455
    %v457 = vrot.slane %v450, %v456
    %v459 = vunpack.c.l.s4 1966171168
    %v460 = vunpack.c.0.s8 %v459
    %v461 = vlaneseq
    %v462 = vshrl.u32 %v461, 7
    %v463 = vsub.s32 %v460, %v462
    %v464 = vrot.slane %v457, %v463
    %v466 = vsel %vm447, %v464, 0.0
    %v467 = vadd.f32 %v425, %v466
    %v468 = vstv %s64
    %v469 = vadd.f32 %v467, %v468
    %v470 = vxor.u32 %v469, 2147483648
    %v471 = vmul.f32 %v470, 1.442695
    %v472 = vpow.pop %v471
    %v473 = vadd.f32 %v472, 1.0
    %v474 = vrcp.pop %v473
    %v475 = vmul.f32 1.0, %v474
    %v477 = vlaneseq
    %v478 = vshrl.u32 %v477, 7
    %v479 = vsub.s32 0, %v478
    %v480 = vrot.slane %v475, %v479
    %v481 = vlaneseq
    %v482 = vshrl.u32 %v481, 7
    %v483 = vsub.s32 1, %v482
    %v484 = vrot.slane %v475, %v483
    %v485 = vcombine.low %v480, %v484
    %v487 = vmul.f32 %v72, %v485
    %488 = vst [vmem:[#allocation8] sm:$0xff] %v487
    %s489 = scalar_lea.vmem [#allocation7], 8
    %v490 = vld [vmem:[%s489] sm:$0xff]
    %v492 = vrot.slane %v490, 5
    %v493 = vrot.slane %v492, 4
    %v495 = vmax.f32 %v490, %v493
    %v496 = vadd.f32 %v490, %v493
    %v497 = vrot.slane %v490, 6
    %v498 = vrot.slane %v497, 4
    %v500 = vmax.f32 %v495, %v498
    %v501 = vadd.f32 %v496, %v498
    %v502 = vrot.slane %v490, 7
    %v503 = vrot.slane %v502, 4
    %v505 = vmax.f32 %v500, %v503
    %v506 = vadd.f32 %v501, %v503
    %v507 = vmul.f32 %v506, 0.25
    %v509 = vlaneseq
    %v510 = vshrl.u32 %v509, 7
    %v511 = vsub.s32 0, %v510
    %v512 = vrot.slane %v505, %v511
    %v513 = vlaneseq
    %v514 = vshrl.u32 %v513, 7
    %v515 = vsub.s32 4, %v514
    %v516 = vrot.slane %v505, %v515
    %519 = vrot.lane.b32.xlu0 %v512, 17
    %v520 = vpop.permute.xlu0 %519
    %521 = vrot.lane.b32.xlu0 %v516, 17
    %v522 = vpop.permute.xlu0 %521
    %v523 = vsel %vm107, %v520, %v522
    %v524 = vsel %vm107, %v522, %v520
    %v525 = vmul.f32 %v524, %v110
    %v526 = vmul.f32 %v523, %v110
    %v528 = vlaneseq
    %v529 = vshrl.u32 %v528, 7
    %v530 = vsub.s32 0, %v529
    %v531 = vrot.slane %v507, %v530
    %v532 = vlaneseq
    %v533 = vshrl.u32 %v532, 7
    %v534 = vsub.s32 4, %v533
    %v535 = vrot.slane %v507, %v534
    %538 = vrot.lane.b32.xlu0 %v531, 17
    %v539 = vpop.permute.xlu0 %538
    %540 = vrot.lane.b32.xlu0 %v535, 17
    %v541 = vpop.permute.xlu0 %540
    %v542 = vsel %vm107, %v539, %v541
    %v543 = vsel %vm107, %v541, %v539
    %v544 = vmul.f32 %v543, %v130
    %v545 = vmul.f32 %v542, %v130
    %v546 = vadd.f32 %v525, %v544
    %v547 = vadd.f32 %v526, %v545
    %v550 = vcombine.low %v546, %v547
    %v552 = vunpack.c.l.s4 1966171168
    %v553 = vunpack.c.0.s8 %v552
    %v554 = vlaneseq
    %v555 = vshrl.u32 %v554, 7
    %v556 = vsub.s32 %v553, %v555
    %v557 = vrot.slane %v550, %v556
    %v559 = vunpack.c.l.s4 1966171168
    %v560 = vunpack.c.0.s8 %v559
    %v561 = vlaneseq
    %v562 = vshrl.u32 %v561, 7
    %v563 = vsub.s32 %v560, %v562
    %v564 = vrot.slane %v557, %v563
    %v566 = vsel %vm135, %v564, 0.0
    %v567 = vadd.f32 %v566, 0.0
    %568 = vrot.lane.b32.xlu0 %v512, 16
    %v569 = vpop.permute.xlu0 %568
    %570 = vrot.lane.b32.xlu0 %v516, 16
    %v571 = vpop.permute.xlu0 %570
    %v572 = vsel %vm160, %v569, %v571
    %v573 = vsel %vm160, %v571, %v569
    %v574 = vmul.f32 %v573, %v163
    %v575 = vmul.f32 %v572, %v163
    %576 = vrot.lane.b32.xlu0 %v531, 16
    %v577 = vpop.permute.xlu0 %576
    %578 = vrot.lane.b32.xlu0 %v535, 16
    %v579 = vpop.permute.xlu0 %578
    %v580 = vsel %vm160, %v577, %v579
    %v581 = vsel %vm160, %v579, %v577
    %v582 = vmul.f32 %v581, %v172
    %v583 = vmul.f32 %v580, %v172
    %v584 = vadd.f32 %v574, %v582
    %v585 = vadd.f32 %v575, %v583
    %v588 = vcombine.low %v584, %v585
    %v590 = vunpack.c.l.s4 1966171168
    %v591 = vunpack.c.0.s8 %v590
    %v592 = vlaneseq
    %v593 = vshrl.u32 %v592, 7
    %v594 = vsub.s32 %v591, %v593
    %v595 = vrot.slane %v588, %v594
    %v597 = vunpack.c.l.s4 1966171168
    %v598 = vunpack.c.0.s8 %v597
    %v599 = vlaneseq
    %v600 = vshrl.u32 %v599, 7
    %v601 = vsub.s32 %v598, %v600
    %v602 = vrot.slane %v595, %v601
    %v604 = vsel %vm68, %v602, 0.0
    %v605 = vadd.f32 %v567, %v604
    %606 = vrot.lane.b32.xlu0 %v512, 15
    %v607 = vpop.permute.xlu0 %606
    %608 = vrot.lane.b32.xlu0 %v516, 15
    %v609 = vpop.permute.xlu0 %608
    %v610 = vsel %vm201, %v607, %v609
    %v611 = vsel %vm201, %v609, %v607
    %v612 = vmul.f32 %v611, %v204
    %v613 = vmul.f32 %v610, %v204
    %614 = vrot.lane.b32.xlu0 %v531, 15
    %v615 = vpop.permute.xlu0 %614
    %616 = vrot.lane.b32.xlu0 %v535, 15
    %v617 = vpop.permute.xlu0 %616
    %v618 = vsel %vm201, %v615, %v617
    %v619 = vsel %vm201, %v617, %v615
    %v620 = vmul.f32 %v619, %v213
    %v621 = vmul.f32 %v618, %v213
    %v622 = vadd.f32 %v612, %v620
    %v623 = vadd.f32 %v613, %v621
    %v626 = vcombine.low %v622, %v623
    %v628 = vunpack.c.l.s4 1966171168
    %v629 = vunpack.c.0.s8 %v628
    %v630 = vlaneseq
    %v631 = vshrl.u32 %v630, 7
    %v632 = vsub.s32 %v629, %v631
    %v633 = vrot.slane %v626, %v632
    %v635 = vunpack.c.l.s4 1966171168
    %v636 = vunpack.c.0.s8 %v635
    %v637 = vlaneseq
    %v638 = vshrl.u32 %v637, 7
    %v639 = vsub.s32 %v636, %v638
    %v640 = vrot.slane %v633, %v639
    %v642 = vsel %vm218, %v640, 0.0
    %v643 = vadd.f32 %v605, %v642
    %644 = vrot.lane.b32.xlu0 %v512, 1
    %v645 = vpop.permute.xlu0 %644
    %646 = vrot.lane.b32.xlu0 %v516, 1
    %v647 = vpop.permute.xlu0 %646
    %v648 = vsel %vm243, %v645, %v647
    %v649 = vsel %vm243, %v647, %v645
    %v650 = vmul.f32 %v649, %v246
    %v651 = vmul.f32 %v648, %v246
    %652 = vrot.lane.b32.xlu0 %v531, 1
    %v653 = vpop.permute.xlu0 %652
    %654 = vrot.lane.b32.xlu0 %v535, 1
    %v655 = vpop.permute.xlu0 %654
    %v656 = vsel %vm243, %v653, %v655
    %v657 = vsel %vm243, %v655, %v653
    %v658 = vmul.f32 %v657, %v255
    %v659 = vmul.f32 %v656, %v255
    %v660 = vadd.f32 %v650, %v658
    %v661 = vadd.f32 %v651, %v659
    %v664 = vcombine.low %v660, %v661
    %v666 = vunpack.c.l.s4 1966171168
    %v667 = vunpack.c.0.s8 %v666
    %v668 = vlaneseq
    %v669 = vshrl.u32 %v668, 7
    %v670 = vsub.s32 %v667, %v669
    %v671 = vrot.slane %v664, %v670
    %v673 = vunpack.c.l.s4 1966171168
    %v674 = vunpack.c.0.s8 %v673
    %v675 = vlaneseq
    %v676 = vshrl.u32 %v675, 7
    %v677 = vsub.s32 %v674, %v676
    %v678 = vrot.slane %v671, %v677
    %v680 = vsel %vm70, %v678, 0.0
    %v681 = vadd.f32 %v643, %v680
    %v682 = vmul.f32 %v505, %v280
    %v683 = vmul.f32 %v507, %v282
    %v684 = vadd.f32 %v682, %v683
    %v687 = vunpack.c.l.s4 1966171168
    %v688 = vunpack.c.0.s8 %v687
    %v689 = vlaneseq
    %v690 = vshrl.u32 %v689, 7
    %v691 = vsub.s32 %v688, %v690
    %v692 = vrot.slane %v684, %v691
    %v694 = vunpack.c.l.s4 1966171168
    %v695 = vunpack.c.0.s8 %v694
    %v696 = vlaneseq
    %v697 = vshrl.u32 %v696, 7
    %v698 = vsub.s32 %v695, %v697
    %v699 = vrot.slane %v692, %v698
    %v701 = vadd.f32 %v681, %v699
    %702 = vrot.lane.b32.xlu0 %v512, 127
    %v703 = vpop.permute.xlu0 %702
    %704 = vrot.lane.b32.xlu0 %v516, 127
    %v705 = vpop.permute.xlu0 %704
    %v706 = vsel %vm306, %v703, %v705
    %v707 = vsel %vm306, %v705, %v703
    %v708 = vmul.f32 %v706, %v309
    %v709 = vmul.f32 %v707, %v309
    %710 = vrot.lane.b32.xlu0 %v531, 127
    %v711 = vpop.permute.xlu0 %710
    %712 = vrot.lane.b32.xlu0 %v535, 127
    %v713 = vpop.permute.xlu0 %712
    %v714 = vsel %vm306, %v711, %v713
    %v715 = vsel %vm306, %v713, %v711
    %v716 = vmul.f32 %v714, %v318
    %v717 = vmul.f32 %v715, %v318
    %v718 = vadd.f32 %v708, %v716
    %v719 = vadd.f32 %v709, %v717
    %v722 = vcombine.low %v718, %v719
    %v724 = vunpack.c.l.s4 1966171168
    %v725 = vunpack.c.0.s8 %v724
    %v726 = vlaneseq
    %v727 = vshrl.u32 %v726, 7
    %v728 = vsub.s32 %v725, %v727
    %v729 = vrot.slane %v722, %v728
    %v731 = vunpack.c.l.s4 1966171168
    %v732 = vunpack.c.0.s8 %v731
    %v733 = vlaneseq
    %v734 = vshrl.u32 %v733, 7
    %v735 = vsub.s32 %v732, %v734
    %v736 = vrot.slane %v729, %v735
    %v738 = vsel %vm71, %v736, 0.0
    %v739 = vadd.f32 %v701, %v738
    %740 = vrot.lane.b32.xlu0 %v512, 113
    %v741 = vpop.permute.xlu0 %740
    %742 = vrot.lane.b32.xlu0 %v516, 113
    %v743 = vpop.permute.xlu0 %742
    %v744 = vsel %vm347, %v741, %v743
    %v745 = vsel %vm347, %v743, %v741
    %v746 = vmul.f32 %v744, %v350
    %v747 = vmul.f32 %v745, %v350
    %748 = vrot.lane.b32.xlu0 %v531, 113
    %v749 = vpop.permute.xlu0 %748
    %750 = vrot.lane.b32.xlu0 %v535, 113
    %v751 = vpop.permute.xlu0 %750
    %v752 = vsel %vm347, %v749, %v751
    %v753 = vsel %vm347, %v751, %v749
    %v754 = vmul.f32 %v752, %v359
    %v755 = vmul.f32 %v753, %v359
    %v756 = vadd.f32 %v746, %v754
    %v757 = vadd.f32 %v747, %v755
    %v760 = vcombine.low %v756, %v757
    %v762 = vunpack.c.l.s4 1966171168
    %v763 = vunpack.c.0.s8 %v762
    %v764 = vlaneseq
    %v765 = vshrl.u32 %v764, 7
    %v766 = vsub.s32 %v763, %v765
    %v767 = vrot.slane %v760, %v766
    %v769 = vunpack.c.l.s4 1966171168
    %v770 = vunpack.c.0.s8 %v769
    %v771 = vlaneseq
    %v772 = vshrl.u32 %v771, 7
    %v773 = vsub.s32 %v770, %v772
    %v774 = vrot.slane %v767, %v773
    %v776 = vsel %vm364, %v774, 0.0
    %v777 = vadd.f32 %v739, %v776
    %778 = vrot.lane.b32.xlu0 %v512, 112
    %v779 = vpop.permute.xlu0 %778
    %780 = vrot.lane.b32.xlu0 %v516, 112
    %v781 = vpop.permute.xlu0 %780
    %v782 = vsel %vm389, %v779, %v781
    %v783 = vsel %vm389, %v781, %v779
    %v784 = vmul.f32 %v782, %v392
    %v785 = vmul.f32 %v783, %v392
    %786 = vrot.lane.b32.xlu0 %v531, 112
    %v787 = vpop.permute.xlu0 %786
    %788 = vrot.lane.b32.xlu0 %v535, 112
    %v789 = vpop.permute.xlu0 %788
    %v790 = vsel %vm389, %v787, %v789
    %v791 = vsel %vm389, %v789, %v787
    %v792 = vmul.f32 %v790, %v401
    %v793 = vmul.f32 %v791, %v401
    %v794 = vadd.f32 %v784, %v792
    %v795 = vadd.f32 %v785, %v793
    %v798 = vcombine.low %v794, %v795
    %v800 = vunpack.c.l.s4 1966171168
    %v801 = vunpack.c.0.s8 %v800
    %v802 = vlaneseq
    %v803 = vshrl.u32 %v802, 7
    %v804 = vsub.s32 %v801, %v803
    %v805 = vrot.slane %v798, %v804
    %v807 = vunpack.c.l.s4 1966171168
    %v808 = vunpack.c.0.s8 %v807
    %v809 = vlaneseq
    %v810 = vshrl.u32 %v809, 7
    %v811 = vsub.s32 %v808, %v810
    %v812 = vrot.slane %v805, %v811
    %v814 = vsel %vm69, %v812, 0.0
    %v815 = vadd.f32 %v777, %v814
    %816 = vrot.lane.b32.xlu0 %v512, 111
    %v817 = vpop.permute.xlu0 %816
    %818 = vrot.lane.b32.xlu0 %v516, 111
    %v819 = vpop.permute.xlu0 %818
    %v820 = vsel %vm430, %v817, %v819
    %v821 = vsel %vm430, %v819, %v817
    %v822 = vmul.f32 %v820, %v433
    %v823 = vmul.f32 %v821, %v433
    %824 = vrot.lane.b32.xlu0 %v531, 111
    %v825 = vpop.permute.xlu0 %824
    %826 = vrot.lane.b32.xlu0 %v535, 111
    %v827 = vpop.permute.xlu0 %826
    %v828 = vsel %vm430, %v825, %v827
    %v829 = vsel %vm430, %v827, %v825
    %v830 = vmul.f32 %v828, %v442
    %v831 = vmul.f32 %v829, %v442
    %v832 = vadd.f32 %v822, %v830
    %v833 = vadd.f32 %v823, %v831
    %v836 = vcombine.low %v832, %v833
    %v838 = vunpack.c.l.s4 1966171168
    %v839 = vunpack.c.0.s8 %v838
    %v840 = vlaneseq
    %v841 = vshrl.u32 %v840, 7
    %v842 = vsub.s32 %v839, %v841
    %v843 = vrot.slane %v836, %v842
    %v845 = vunpack.c.l.s4 1966171168
    %v846 = vunpack.c.0.s8 %v845
    %v847 = vlaneseq
    %v848 = vshrl.u32 %v847, 7
    %v849 = vsub.s32 %v846, %v848
    %v850 = vrot.slane %v843, %v849
    %v852 = vsel %vm447, %v850, 0.0
    %v853 = vadd.f32 %v815, %v852
    %v854 = vadd.f32 %v853, %v468
    %v855 = vxor.u32 %v854, 2147483648
    %v856 = vmul.f32 %v855, 1.442695
    %v857 = vpow.pop %v856
    %v858 = vadd.f32 %v857, 1.0
    %v859 = vrcp.pop %v858
    %v860 = vmul.f32 1.0, %v859
    %v862 = vlaneseq
    %v863 = vshrl.u32 %v862, 7
    %v864 = vsub.s32 0, %v863
    %v865 = vrot.slane %v860, %v864
    %v866 = vlaneseq
    %v867 = vshrl.u32 %v866, 7
    %v868 = vsub.s32 1, %v867
    %v869 = vrot.slane %v860, %v868
    %v870 = vcombine.low %v865, %v869
    %v872 = vmul.f32 %v490, %v870
    %s873 = scalar_lea.vmem [#allocation8], 8
    %874 = vst [vmem:[%s873] sm:$0xff] %v872
    // Predicated region
    $region26: #{tpu_custom_call.1} parent=1 // pred_check
      _
    $region27: #{tpu_custom_call.1} parent=1 // pred_check_branch
      %876 = sbr.rel (0) target = $region29
    $region28: #{tpu_custom_call.1} parent=1 // pred_region
      %s878 = ssub.s32 256, 256
      %879 = vsyncadd [#allocation5], %s878
      %s880 = sshll.u32 [#allocation8], 4
      %s881 = int_to_ptr.vmem [resolvable:$true] %s880
      %886 = dma.vmem_to_hbm [thread:$0]  %s881, 256, %s4, [#allocation5], 128, 128, 8
    $region29: #{tpu_custom_call.1} parent=1 // pred_fallthru
      _
    // Predicated region
    $region30: #{tpu_custom_call.1} parent=1 // pred_check
      _
    $region31: #{tpu_custom_call.1} parent=1 // pred_check_branch
      %888 = sbr.rel (0) target = $region33
    $region32: #{tpu_custom_call.1} parent=1 // pred_region
      %889 = dma.done [#allocation5], 256
    $region33: #{tpu_custom_call.1} parent=1 // pred_fallthru
      _
    %890 = vsyncpa [#allocation4], 1
    %891 = vsyncpa [#allocation5], 1
    %892 = vsyncpa [#allocation6], 1

</llo_original>
